<compile_context>
chip_gen: v6e
topology: v6e:2x2x1
jax: 0.10.0
libtpu: 0.0.40
codegen_flags: <defaults>
</compile_context>

<pallas_src>
from functools import partial

import jax
import jax.numpy as jnp
from jax.experimental import pallas as pl
from jax.experimental.pallas import tpu as pltpu


def _softplus(z):
    # numerically-stable softplus(z) = log(1 + exp(z)); matches F.softplus(z, beta=1)
    return jnp.maximum(z, 0.0) + jnp.log1p(jnp.exp(-jnp.abs(z)))


def _slab_layout(K):
    """Row offsets of each parameter inside the packed (rows, max(8, K)) slab."""
    entries = [("w1", 10), ("b1", 1), ("w2", 8), ("b2", 1),
               ("w3m", 6), ("b3m", 1), ("w3s", 6), ("b3s", 1),
               ("wd", K), ("bd", 1),
               ("wbwm", 2), ("bbwm", 1), ("wbws", 2), ("bbws", 1)]
    offs, r = {}, 0
    for name, n in entries:
        offs[name] = r
        r += n
    return offs, r


def toynet_kernel(K, xeps_ref, p_ref, out_ref):
    offs, _ = _slab_layout(K)

    def mat(name, rows, width):
        r = offs[name]
        return p_ref[r:r + rows, 0:width]

    def row(name, width):
        return mat(name, 1, width)

    def mac(x, w):
        # (B, In) @ (In, Out) with In <= 10: unrolled broadcast-multiply-accumulate
        # keeps the contraction on the VPU (no MXU round trip at these sizes).
        acc = x[:, 0:1] * w[0:1, :]
        for i in range(1, w.shape[0]):
            acc = acc + x[:, i:i + 1] * w[i:i + 1, :]
        return acc

    x = xeps_ref[:, 0:10]
    eps = xeps_ref[:, 10:10 + K]

    # --- encode: Linear(10,8)+ReLU -> Linear(8,6)+ReLU -> Linear(6,2K) (split halves) ---
    h1 = jnp.maximum(mac(x, mat("w1", 10, 8)) + row("b1", 8), 0.0)
    h2 = jnp.maximum(mac(h1, mat("w2", 8, 6)) + row("b2", 6), 0.0)
    mu = mac(h2, mat("w3m", 6, K)) + row("b3m", K)
    std = _softplus(mac(h2, mat("w3s", 6, K)) + row("b3s", K) - 5.0)

    # --- reparametrize_n (num_sample == 1): mu + eps * std ---
    encoding = mu + eps * std

    # --- decode: Linear(K, 2) ---
    logit = mac(encoding, mat("wd", K, 2)) + row("bd", 2)

    # --- one_hot(argmax(softmax(logit))) @ Linear(2,2K)  ==  pick row 0/1 of wbw ---
    # softmax is monotone so argmax(logit); ties resolve to index 0 (torch.max semantics)
    is_one = logit[:, 1:2] > logit[:, 0:1]                       # (B, 1)
    wbwm = mat("wbwm", 2, K)
    wbws = mat("wbws", 2, K)
    mu2 = jnp.where(is_one, wbwm[1:2, :], wbwm[0:1, :]) + row("bbwm", K)
    std2 = _softplus(jnp.where(is_one, wbws[1:2, :], wbws[0:1, :]) + row("bbws", K) - 5.0)

    # --- single lane-dense output slab: [mu | std | logit | mu2 | std2] ---
    o = 0
    out_ref[:, o:o + K] = mu
    o += K
    out_ref[:, o:o + K] = std
    o += K
    out_ref[:, o:o + 2] = logit
    o += 2
    out_ref[:, o:o + K] = mu2
    o += K
    out_ref[:, o:o + K] = std2


def pack_toynet_params(params, K):
    """Pack the 10 weight/bias arrays into one slab (do once at setup time)."""
    (w1, b1, w2, b2, w3, b3, wd, bd, wbw, bbw) = params
    offs, rows = _slab_layout(K)
    width = max(8, K)
    slab = jnp.zeros((rows, width), jnp.float32)
    slab = slab.at[offs["w1"]:offs["w1"] + 10, 0:8].set(w1)
    slab = slab.at[offs["b1"], 0:8].set(b1)
    slab = slab.at[offs["w2"]:offs["w2"] + 8, 0:6].set(w2)
    slab = slab.at[offs["b2"], 0:6].set(b2)
    slab = slab.at[offs["w3m"]:offs["w3m"] + 6, 0:K].set(w3[:, :K])
    slab = slab.at[offs["b3m"], 0:K].set(b3[:K])
    slab = slab.at[offs["w3s"]:offs["w3s"] + 6, 0:K].set(w3[:, K:])
    slab = slab.at[offs["b3s"], 0:K].set(b3[K:])
    slab = slab.at[offs["wd"]:offs["wd"] + K, 0:2].set(wd)
    slab = slab.at[offs["bd"], 0:2].set(bd)
    slab = slab.at[offs["wbwm"]:offs["wbwm"] + 2, 0:K].set(wbw[:, :K])
    slab = slab.at[offs["bbwm"], 0:K].set(bbw[:K])
    slab = slab.at[offs["wbws"]:offs["wbws"] + 2, 0:K].set(wbw[:, K:])
    slab = slab.at[offs["bbws"], 0:K].set(bbw[K:])
    return slab


def toynet_forward(x, eps, params, K):
    """Whole ToyNet forward in one Pallas kernel: 2 input DMAs, 1 output DMA."""
    if x.ndim > 2:
        x = x.reshape(x.shape[0], -1)
    B = x.shape[0]

    xeps = jnp.concatenate([x.astype(jnp.float32), eps.astype(jnp.float32)], axis=1)
    slab = pack_toynet_params(params, K)

    vmem = pl.BlockSpec(memory_space=pltpu.MemorySpace.VMEM)
    n_out = 4 * K + 2
    out = pl.pallas_call(
        partial(toynet_kernel, K),
        out_shape=jax.ShapeDtypeStruct((B, n_out), jnp.float32),
        in_specs=[vmem, vmem],
        out_specs=vmem,
    )(xeps, slab)

    mu = out[:, 0:K]
    std = out[:, K:2 * K]
    logit = out[:, 2 * K:2 * K + 2]
    mu2 = out[:, 2 * K + 2:3 * K + 2]
    std2 = out[:, 3 * K + 2:4 * K + 2]
    return (mu, std), logit, (mu2, std2)


def toynet_reference(x, eps, params, K):
    """Pure-JAX reference of the PyTorch forward (num_sample=1 path)."""
    (w1, b1, w2, b2, w3, b3, wd, bd, wbw, bbw) = params
    if x.ndim > 2:
        x = x.reshape(x.shape[0], -1)
    dot = partial(jnp.dot, precision=jax.lax.Precision.HIGHEST)
    h1 = jnp.maximum(dot(x, w1) + b1, 0.0)
    h2 = jnp.maximum(dot(h1, w2) + b2, 0.0)
    stats = dot(h2, w3) + b3
    mu = stats[:, :K]
    std = _softplus(stats[:, K:] - 5.0)
    enc = mu + eps * std
    logit = dot(enc, wd) + bd
    one_hot = jax.nn.one_hot(jnp.argmax(logit, axis=1), 2, dtype=jnp.float32)
    stats2 = dot(one_hot, wbw) + bbw
    mu2 = stats2[:, :K]
    std2 = _softplus(stats2[:, K:] - 5.0)
    return (mu, std), logit, (mu2, std2)


def _xavier_relu(key, fan_in, fan_out):
    # matches nn.init.xavier_uniform_(w, gain=calculate_gain('relu')); stored as (in, out)
    gain = jnp.sqrt(2.0)
    bound = gain * jnp.sqrt(6.0 / (fan_in + fan_out))
    return jax.random.uniform(key, (fan_in, fan_out), jnp.float32, -bound, bound)


if __name__ == "__main__":
    K = 4            # bottleneck size
    B = 2            # args.batch_size

    key = jax.random.PRNGKey(0)
    keys = jax.random.split(key, 12)

    # deterministic parameter init (xavier-uniform/relu weights; small non-zero
    # biases to exercise the bias packing — forward semantics are unchanged)
    w1 = _xavier_relu(keys[0], 10, 8)
    b1 = 0.1 * jax.random.normal(keys[1], (8,), jnp.float32)
    w2 = _xavier_relu(keys[2], 8, 6)
    b2 = 0.1 * jax.random.normal(keys[3], (6,), jnp.float32)
    w3 = _xavier_relu(keys[4], 6, 2 * K)
    b3 = 0.1 * jax.random.normal(keys[5], (2 * K,), jnp.float32)
    wd = _xavier_relu(keys[6], K, 2)
    bd = 0.1 * jax.random.normal(keys[7], (2,), jnp.float32)
    wbw = _xavier_relu(keys[8], 2, 2 * K)
    bbw = 0.1 * jax.random.normal(keys[9], (2 * K,), jnp.float32)
    params = (w1, b1, w2, b2, w3, b3, wd, bd, wbw, bbw)

    x = jax.random.normal(keys[10], (B, 10), jnp.float32)
    eps = jax.random.normal(keys[11], (B, K), jnp.float32)   # reparametrization noise

    (mu, std), logit, (mu2, std2) = toynet_forward(x, eps, params, K)
    jax.block_until_ready((mu, std, logit, mu2, std2))

    assert mu.shape == (B, K) and std.shape == (B, K)
    assert logit.shape == (B, 2)
    assert mu2.shape == (B, K) and std2.shape == (B, K)

    # numerical parity with pure-JAX reference of the PyTorch forward
    (rmu, rstd), rlogit, (rmu2, rstd2) = toynet_reference(x, eps, params, K)
    for got, want in ((mu, rmu), (std, rstd), (logit, rlogit), (mu2, rmu2), (std2, rstd2)):
        assert jnp.allclose(got, want, atol=1e-5, rtol=1e-5)

    print("KERNEL_OK")
</pallas_src>

<mosaic_0001>
module attributes {stable_mosaic.version = 11 : i64} {
  func.func @toynet_kernel(%arg0: memref<2x14xf32, #tpu.memory_space<vmem>>, %arg1: memref<45x8xf32, #tpu.memory_space<vmem>>, %arg2: memref<2x18xf32, #tpu.memory_space<vmem>>) attributes {dimension_semantics = [], scalar_prefetch = 0 : i64, scratch_operands = 0 : i64, tpu.core_type = #tpu.core_type<tc>} {
    %c0 = arith.constant 0 : index
    %c0_0 = arith.constant 0 : index
    %0 = vector.load %arg0[%c0, %c0_0] : memref<2x14xf32, #tpu.memory_space<vmem>>, vector<2x10xf32>
    %c0_1 = arith.constant 0 : index
    %c10 = arith.constant 10 : index
    %1 = vector.load %arg0[%c0_1, %c10] : memref<2x14xf32, #tpu.memory_space<vmem>>, vector<2x4xf32>
    %c0_2 = arith.constant 0 : index
    %c0_3 = arith.constant 0 : index
    %2 = vector.load %arg1[%c0_2, %c0_3] : memref<45x8xf32, #tpu.memory_space<vmem>>, vector<10x8xf32>
    %3 = vector.extract_strided_slice %0 {offsets = [0, 0], sizes = [2, 1], strides = [1, 1]} : vector<2x10xf32> to vector<2x1xf32>
    %4 = vector.extract_strided_slice %2 {offsets = [0, 0], sizes = [1, 8], strides = [1, 1]} : vector<10x8xf32> to vector<1x8xf32>
    %5 = vector.broadcast %3 : vector<2x1xf32> to vector<2x8xf32>
    %6 = vector.broadcast %4 : vector<1x8xf32> to vector<2x8xf32>
    %7 = arith.mulf %5, %6 : vector<2x8xf32>
    %8 = vector.extract_strided_slice %0 {offsets = [0, 1], sizes = [2, 1], strides = [1, 1]} : vector<2x10xf32> to vector<2x1xf32>
    %9 = vector.extract_strided_slice %2 {offsets = [1, 0], sizes = [1, 8], strides = [1, 1]} : vector<10x8xf32> to vector<1x8xf32>
    %10 = vector.broadcast %8 : vector<2x1xf32> to vector<2x8xf32>
    %11 = vector.broadcast %9 : vector<1x8xf32> to vector<2x8xf32>
    %12 = arith.mulf %10, %11 : vector<2x8xf32>
    %13 = arith.addf %7, %12 : vector<2x8xf32>
    %14 = vector.extract_strided_slice %0 {offsets = [0, 2], sizes = [2, 1], strides = [1, 1]} : vector<2x10xf32> to vector<2x1xf32>
    %15 = vector.extract_strided_slice %2 {offsets = [2, 0], sizes = [1, 8], strides = [1, 1]} : vector<10x8xf32> to vector<1x8xf32>
    %16 = vector.broadcast %14 : vector<2x1xf32> to vector<2x8xf32>
    %17 = vector.broadcast %15 : vector<1x8xf32> to vector<2x8xf32>
    %18 = arith.mulf %16, %17 : vector<2x8xf32>
    %19 = arith.addf %13, %18 : vector<2x8xf32>
    %20 = vector.extract_strided_slice %0 {offsets = [0, 3], sizes = [2, 1], strides = [1, 1]} : vector<2x10xf32> to vector<2x1xf32>
    %21 = vector.extract_strided_slice %2 {offsets = [3, 0], sizes = [1, 8], strides = [1, 1]} : vector<10x8xf32> to vector<1x8xf32>
    %22 = vector.broadcast %20 : vector<2x1xf32> to vector<2x8xf32>
    %23 = vector.broadcast %21 : vector<1x8xf32> to vector<2x8xf32>
    %24 = arith.mulf %22, %23 : vector<2x8xf32>
    %25 = arith.addf %19, %24 : vector<2x8xf32>
    %26 = vector.extract_strided_slice %0 {offsets = [0, 4], sizes = [2, 1], strides = [1, 1]} : vector<2x10xf32> to vector<2x1xf32>
    %27 = vector.extract_strided_slice %2 {offsets = [4, 0], sizes = [1, 8], strides = [1, 1]} : vector<10x8xf32> to vector<1x8xf32>
    %28 = vector.broadcast %26 : vector<2x1xf32> to vector<2x8xf32>
    %29 = vector.broadcast %27 : vector<1x8xf32> to vector<2x8xf32>
    %30 = arith.mulf %28, %29 : vector<2x8xf32>
    %31 = arith.addf %25, %30 : vector<2x8xf32>
    %32 = vector.extract_strided_slice %0 {offsets = [0, 5], sizes = [2, 1], strides = [1, 1]} : vector<2x10xf32> to vector<2x1xf32>
    %33 = vector.extract_strided_slice %2 {offsets = [5, 0], sizes = [1, 8], strides = [1, 1]} : vector<10x8xf32> to vector<1x8xf32>
    %34 = vector.broadcast %32 : vector<2x1xf32> to vector<2x8xf32>
    %35 = vector.broadcast %33 : vector<1x8xf32> to vector<2x8xf32>
    %36 = arith.mulf %34, %35 : vector<2x8xf32>
    %37 = arith.addf %31, %36 : vector<2x8xf32>
    %38 = vector.extract_strided_slice %0 {offsets = [0, 6], sizes = [2, 1], strides = [1, 1]} : vector<2x10xf32> to vector<2x1xf32>
    %39 = vector.extract_strided_slice %2 {offsets = [6, 0], sizes = [1, 8], strides = [1, 1]} : vector<10x8xf32> to vector<1x8xf32>
    %40 = vector.broadcast %38 : vector<2x1xf32> to vector<2x8xf32>
    %41 = vector.broadcast %39 : vector<1x8xf32> to vector<2x8xf32>
    %42 = arith.mulf %40, %41 : vector<2x8xf32>
    %43 = arith.addf %37, %42 : vector<2x8xf32>
    %44 = vector.extract_strided_slice %0 {offsets = [0, 7], sizes = [2, 1], strides = [1, 1]} : vector<2x10xf32> to vector<2x1xf32>
    %45 = vector.extract_strided_slice %2 {offsets = [7, 0], sizes = [1, 8], strides = [1, 1]} : vector<10x8xf32> to vector<1x8xf32>
    %46 = vector.broadcast %44 : vector<2x1xf32> to vector<2x8xf32>
    %47 = vector.broadcast %45 : vector<1x8xf32> to vector<2x8xf32>
    %48 = arith.mulf %46, %47 : vector<2x8xf32>
    %49 = arith.addf %43, %48 : vector<2x8xf32>
    %50 = vector.extract_strided_slice %0 {offsets = [0, 8], sizes = [2, 1], strides = [1, 1]} : vector<2x10xf32> to vector<2x1xf32>
    %51 = vector.extract_strided_slice %2 {offsets = [8, 0], sizes = [1, 8], strides = [1, 1]} : vector<10x8xf32> to vector<1x8xf32>
    %52 = vector.broadcast %50 : vector<2x1xf32> to vector<2x8xf32>
    %53 = vector.broadcast %51 : vector<1x8xf32> to vector<2x8xf32>
    %54 = arith.mulf %52, %53 : vector<2x8xf32>
    %55 = arith.addf %49, %54 : vector<2x8xf32>
    %56 = vector.extract_strided_slice %0 {offsets = [0, 9], sizes = [2, 1], strides = [1, 1]} : vector<2x10xf32> to vector<2x1xf32>
    %57 = vector.extract_strided_slice %2 {offsets = [9, 0], sizes = [1, 8], strides = [1, 1]} : vector<10x8xf32> to vector<1x8xf32>
    %58 = vector.broadcast %56 : vector<2x1xf32> to vector<2x8xf32>
    %59 = vector.broadcast %57 : vector<1x8xf32> to vector<2x8xf32>
    %60 = arith.mulf %58, %59 : vector<2x8xf32>
    %61 = arith.addf %55, %60 : vector<2x8xf32>
    %c10_4 = arith.constant 10 : index
    %c0_5 = arith.constant 0 : index
    %62 = vector.load %arg1[%c10_4, %c0_5] : memref<45x8xf32, #tpu.memory_space<vmem>>, vector<1x8xf32>
    %63 = vector.broadcast %62 : vector<1x8xf32> to vector<2x8xf32>
    %64 = arith.addf %61, %63 : vector<2x8xf32>
    %cst = arith.constant 0.000000e+00 : f32
    %65 = vector.broadcast %cst : f32 to vector<2x8xf32>
    %66 = arith.maximumf %64, %65 : vector<2x8xf32>
    %c11 = arith.constant 11 : index
    %c0_6 = arith.constant 0 : index
    %67 = vector.load %arg1[%c11, %c0_6] : memref<45x8xf32, #tpu.memory_space<vmem>>, vector<8x6xf32>
    %68 = vector.extract_strided_slice %66 {offsets = [0, 0], sizes = [2, 1], strides = [1, 1]} : vector<2x8xf32> to vector<2x1xf32>
    %69 = vector.extract_strided_slice %67 {offsets = [0, 0], sizes = [1, 6], strides = [1, 1]} : vector<8x6xf32> to vector<1x6xf32>
    %70 = vector.broadcast %68 : vector<2x1xf32> to vector<2x6xf32>
    %71 = vector.broadcast %69 : vector<1x6xf32> to vector<2x6xf32>
    %72 = arith.mulf %70, %71 : vector<2x6xf32>
    %73 = vector.extract_strided_slice %66 {offsets = [0, 1], sizes = [2, 1], strides = [1, 1]} : vector<2x8xf32> to vector<2x1xf32>
    %74 = vector.extract_strided_slice %67 {offsets = [1, 0], sizes = [1, 6], strides = [1, 1]} : vector<8x6xf32> to vector<1x6xf32>
    %75 = vector.broadcast %73 : vector<2x1xf32> to vector<2x6xf32>
    %76 = vector.broadcast %74 : vector<1x6xf32> to vector<2x6xf32>
    %77 = arith.mulf %75, %76 : vector<2x6xf32>
    %78 = arith.addf %72, %77 : vector<2x6xf32>
    %79 = vector.extract_strided_slice %66 {offsets = [0, 2], sizes = [2, 1], strides = [1, 1]} : vector<2x8xf32> to vector<2x1xf32>
    %80 = vector.extract_strided_slice %67 {offsets = [2, 0], sizes = [1, 6], strides = [1, 1]} : vector<8x6xf32> to vector<1x6xf32>
    %81 = vector.broadcast %79 : vector<2x1xf32> to vector<2x6xf32>
    %82 = vector.broadcast %80 : vector<1x6xf32> to vector<2x6xf32>
    %83 = arith.mulf %81, %82 : vector<2x6xf32>
    %84 = arith.addf %78, %83 : vector<2x6xf32>
    %85 = vector.extract_strided_slice %66 {offsets = [0, 3], sizes = [2, 1], strides = [1, 1]} : vector<2x8xf32> to vector<2x1xf32>
    %86 = vector.extract_strided_slice %67 {offsets = [3, 0], sizes = [1, 6], strides = [1, 1]} : vector<8x6xf32> to vector<1x6xf32>
    %87 = vector.broadcast %85 : vector<2x1xf32> to vector<2x6xf32>
    %88 = vector.broadcast %86 : vector<1x6xf32> to vector<2x6xf32>
    %89 = arith.mulf %87, %88 : vector<2x6xf32>
    %90 = arith.addf %84, %89 : vector<2x6xf32>
    %91 = vector.extract_strided_slice %66 {offsets = [0, 4], sizes = [2, 1], strides = [1, 1]} : vector<2x8xf32> to vector<2x1xf32>
    %92 = vector.extract_strided_slice %67 {offsets = [4, 0], sizes = [1, 6], strides = [1, 1]} : vector<8x6xf32> to vector<1x6xf32>
    %93 = vector.broadcast %91 : vector<2x1xf32> to vector<2x6xf32>
    %94 = vector.broadcast %92 : vector<1x6xf32> to vector<2x6xf32>
    %95 = arith.mulf %93, %94 : vector<2x6xf32>
    %96 = arith.addf %90, %95 : vector<2x6xf32>
    %97 = vector.extract_strided_slice %66 {offsets = [0, 5], sizes = [2, 1], strides = [1, 1]} : vector<2x8xf32> to vector<2x1xf32>
    %98 = vector.extract_strided_slice %67 {offsets = [5, 0], sizes = [1, 6], strides = [1, 1]} : vector<8x6xf32> to vector<1x6xf32>
    %99 = vector.broadcast %97 : vector<2x1xf32> to vector<2x6xf32>
    %100 = vector.broadcast %98 : vector<1x6xf32> to vector<2x6xf32>
    %101 = arith.mulf %99, %100 : vector<2x6xf32>
    %102 = arith.addf %96, %101 : vector<2x6xf32>
    %103 = vector.extract_strided_slice %66 {offsets = [0, 6], sizes = [2, 1], strides = [1, 1]} : vector<2x8xf32> to vector<2x1xf32>
    %104 = vector.extract_strided_slice %67 {offsets = [6, 0], sizes = [1, 6], strides = [1, 1]} : vector<8x6xf32> to vector<1x6xf32>
    %105 = vector.broadcast %103 : vector<2x1xf32> to vector<2x6xf32>
    %106 = vector.broadcast %104 : vector<1x6xf32> to vector<2x6xf32>
    %107 = arith.mulf %105, %106 : vector<2x6xf32>
    %108 = arith.addf %102, %107 : vector<2x6xf32>
    %109 = vector.extract_strided_slice %66 {offsets = [0, 7], sizes = [2, 1], strides = [1, 1]} : vector<2x8xf32> to vector<2x1xf32>
    %110 = vector.extract_strided_slice %67 {offsets = [7, 0], sizes = [1, 6], strides = [1, 1]} : vector<8x6xf32> to vector<1x6xf32>
    %111 = vector.broadcast %109 : vector<2x1xf32> to vector<2x6xf32>
    %112 = vector.broadcast %110 : vector<1x6xf32> to vector<2x6xf32>
    %113 = arith.mulf %111, %112 : vector<2x6xf32>
    %114 = arith.addf %108, %113 : vector<2x6xf32>
    %c19 = arith.constant 19 : index
    %c0_7 = arith.constant 0 : index
    %115 = vector.load %arg1[%c19, %c0_7] : memref<45x8xf32, #tpu.memory_space<vmem>>, vector<1x6xf32>
    %116 = vector.broadcast %115 : vector<1x6xf32> to vector<2x6xf32>
    %117 = arith.addf %114, %116 : vector<2x6xf32>
    %cst_8 = arith.constant 0.000000e+00 : f32
    %118 = vector.broadcast %cst_8 : f32 to vector<2x6xf32>
    %119 = arith.maximumf %117, %118 : vector<2x6xf32>
    %c20 = arith.constant 20 : index
    %c0_9 = arith.constant 0 : index
    %120 = vector.load %arg1[%c20, %c0_9] : memref<45x8xf32, #tpu.memory_space<vmem>>, vector<6x4xf32>
    %121 = vector.extract_strided_slice %119 {offsets = [0, 0], sizes = [2, 1], strides = [1, 1]} : vector<2x6xf32> to vector<2x1xf32>
    %122 = vector.extract_strided_slice %120 {offsets = [0, 0], sizes = [1, 4], strides = [1, 1]} : vector<6x4xf32> to vector<1x4xf32>
    %123 = vector.broadcast %121 : vector<2x1xf32> to vector<2x4xf32>
    %124 = vector.broadcast %122 : vector<1x4xf32> to vector<2x4xf32>
    %125 = arith.mulf %123, %124 : vector<2x4xf32>
    %126 = vector.extract_strided_slice %119 {offsets = [0, 1], sizes = [2, 1], strides = [1, 1]} : vector<2x6xf32> to vector<2x1xf32>
    %127 = vector.extract_strided_slice %120 {offsets = [1, 0], sizes = [1, 4], strides = [1, 1]} : vector<6x4xf32> to vector<1x4xf32>
    %128 = vector.broadcast %126 : vector<2x1xf32> to vector<2x4xf32>
    %129 = vector.broadcast %127 : vector<1x4xf32> to vector<2x4xf32>
    %130 = arith.mulf %128, %129 : vector<2x4xf32>
    %131 = arith.addf %125, %130 : vector<2x4xf32>
    %132 = vector.extract_strided_slice %119 {offsets = [0, 2], sizes = [2, 1], strides = [1, 1]} : vector<2x6xf32> to vector<2x1xf32>
    %133 = vector.extract_strided_slice %120 {offsets = [2, 0], sizes = [1, 4], strides = [1, 1]} : vector<6x4xf32> to vector<1x4xf32>
    %134 = vector.broadcast %132 : vector<2x1xf32> to vector<2x4xf32>
    %135 = vector.broadcast %133 : vector<1x4xf32> to vector<2x4xf32>
    %136 = arith.mulf %134, %135 : vector<2x4xf32>
    %137 = arith.addf %131, %136 : vector<2x4xf32>
    %138 = vector.extract_strided_slice %119 {offsets = [0, 3], sizes = [2, 1], strides = [1, 1]} : vector<2x6xf32> to vector<2x1xf32>
    %139 = vector.extract_strided_slice %120 {offsets = [3, 0], sizes = [1, 4], strides = [1, 1]} : vector<6x4xf32> to vector<1x4xf32>
    %140 = vector.broadcast %138 : vector<2x1xf32> to vector<2x4xf32>
    %141 = vector.broadcast %139 : vector<1x4xf32> to vector<2x4xf32>
    %142 = arith.mulf %140, %141 : vector<2x4xf32>
    %143 = arith.addf %137, %142 : vector<2x4xf32>
    %144 = vector.extract_strided_slice %119 {offsets = [0, 4], sizes = [2, 1], strides = [1, 1]} : vector<2x6xf32> to vector<2x1xf32>
    %145 = vector.extract_strided_slice %120 {offsets = [4, 0], sizes = [1, 4], strides = [1, 1]} : vector<6x4xf32> to vector<1x4xf32>
    %146 = vector.broadcast %144 : vector<2x1xf32> to vector<2x4xf32>
    %147 = vector.broadcast %145 : vector<1x4xf32> to vector<2x4xf32>
    %148 = arith.mulf %146, %147 : vector<2x4xf32>
    %149 = arith.addf %143, %148 : vector<2x4xf32>
    %150 = vector.extract_strided_slice %119 {offsets = [0, 5], sizes = [2, 1], strides = [1, 1]} : vector<2x6xf32> to vector<2x1xf32>
    %151 = vector.extract_strided_slice %120 {offsets = [5, 0], sizes = [1, 4], strides = [1, 1]} : vector<6x4xf32> to vector<1x4xf32>
    %152 = vector.broadcast %150 : vector<2x1xf32> to vector<2x4xf32>
    %153 = vector.broadcast %151 : vector<1x4xf32> to vector<2x4xf32>
    %154 = arith.mulf %152, %153 : vector<2x4xf32>
    %155 = arith.addf %149, %154 : vector<2x4xf32>
    %c26 = arith.constant 26 : index
    %c0_10 = arith.constant 0 : index
    %156 = vector.load %arg1[%c26, %c0_10] : memref<45x8xf32, #tpu.memory_space<vmem>>, vector<1x4xf32>
    %157 = vector.broadcast %156 : vector<1x4xf32> to vector<2x4xf32>
    %158 = arith.addf %155, %157 : vector<2x4xf32>
    %c27 = arith.constant 27 : index
    %c0_11 = arith.constant 0 : index
    %159 = vector.load %arg1[%c27, %c0_11] : memref<45x8xf32, #tpu.memory_space<vmem>>, vector<6x4xf32>
    %160 = vector.extract_strided_slice %119 {offsets = [0, 0], sizes = [2, 1], strides = [1, 1]} : vector<2x6xf32> to vector<2x1xf32>
    %161 = vector.extract_strided_slice %159 {offsets = [0, 0], sizes = [1, 4], strides = [1, 1]} : vector<6x4xf32> to vector<1x4xf32>
    %162 = vector.broadcast %160 : vector<2x1xf32> to vector<2x4xf32>
    %163 = vector.broadcast %161 : vector<1x4xf32> to vector<2x4xf32>
    %164 = arith.mulf %162, %163 : vector<2x4xf32>
    %165 = vector.extract_strided_slice %119 {offsets = [0, 1], sizes = [2, 1], strides = [1, 1]} : vector<2x6xf32> to vector<2x1xf32>
    %166 = vector.extract_strided_slice %159 {offsets = [1, 0], sizes = [1, 4], strides = [1, 1]} : vector<6x4xf32> to vector<1x4xf32>
    %167 = vector.broadcast %165 : vector<2x1xf32> to vector<2x4xf32>
    %168 = vector.broadcast %166 : vector<1x4xf32> to vector<2x4xf32>
    %169 = arith.mulf %167, %168 : vector<2x4xf32>
    %170 = arith.addf %164, %169 : vector<2x4xf32>
    %171 = vector.extract_strided_slice %119 {offsets = [0, 2], sizes = [2, 1], strides = [1, 1]} : vector<2x6xf32> to vector<2x1xf32>
    %172 = vector.extract_strided_slice %159 {offsets = [2, 0], sizes = [1, 4], strides = [1, 1]} : vector<6x4xf32> to vector<1x4xf32>
    %173 = vector.broadcast %171 : vector<2x1xf32> to vector<2x4xf32>
    %174 = vector.broadcast %172 : vector<1x4xf32> to vector<2x4xf32>
    %175 = arith.mulf %173, %174 : vector<2x4xf32>
    %176 = arith.addf %170, %175 : vector<2x4xf32>
    %177 = vector.extract_strided_slice %119 {offsets = [0, 3], sizes = [2, 1], strides = [1, 1]} : vector<2x6xf32> to vector<2x1xf32>
    %178 = vector.extract_strided_slice %159 {offsets = [3, 0], sizes = [1, 4], strides = [1, 1]} : vector<6x4xf32> to vector<1x4xf32>
    %179 = vector.broadcast %177 : vector<2x1xf32> to vector<2x4xf32>
    %180 = vector.broadcast %178 : vector<1x4xf32> to vector<2x4xf32>
    %181 = arith.mulf %179, %180 : vector<2x4xf32>
    %182 = arith.addf %176, %181 : vector<2x4xf32>
    %183 = vector.extract_strided_slice %119 {offsets = [0, 4], sizes = [2, 1], strides = [1, 1]} : vector<2x6xf32> to vector<2x1xf32>
    %184 = vector.extract_strided_slice %159 {offsets = [4, 0], sizes = [1, 4], strides = [1, 1]} : vector<6x4xf32> to vector<1x4xf32>
    %185 = vector.broadcast %183 : vector<2x1xf32> to vector<2x4xf32>
    %186 = vector.broadcast %184 : vector<1x4xf32> to vector<2x4xf32>
    %187 = arith.mulf %185, %186 : vector<2x4xf32>
    %188 = arith.addf %182, %187 : vector<2x4xf32>
    %189 = vector.extract_strided_slice %119 {offsets = [0, 5], sizes = [2, 1], strides = [1, 1]} : vector<2x6xf32> to vector<2x1xf32>
    %190 = vector.extract_strided_slice %159 {offsets = [5, 0], sizes = [1, 4], strides = [1, 1]} : vector<6x4xf32> to vector<1x4xf32>
    %191 = vector.broadcast %189 : vector<2x1xf32> to vector<2x4xf32>
    %192 = vector.broadcast %190 : vector<1x4xf32> to vector<2x4xf32>
    %193 = arith.mulf %191, %192 : vector<2x4xf32>
    %194 = arith.addf %188, %193 : vector<2x4xf32>
    %c33 = arith.constant 33 : index
    %c0_12 = arith.constant 0 : index
    %195 = vector.load %arg1[%c33, %c0_12] : memref<45x8xf32, #tpu.memory_space<vmem>>, vector<1x4xf32>
    %196 = vector.broadcast %195 : vector<1x4xf32> to vector<2x4xf32>
    %197 = arith.addf %194, %196 : vector<2x4xf32>
    %cst_13 = arith.constant 5.000000e+00 : f32
    %198 = vector.broadcast %cst_13 : f32 to vector<2x4xf32>
    %199 = arith.subf %197, %198 : vector<2x4xf32>
    %cst_14 = arith.constant 0.000000e+00 : f32
    %200 = vector.broadcast %cst_14 : f32 to vector<2x4xf32>
    %201 = arith.maximumf %199, %200 : vector<2x4xf32>
    %202 = math.absf %199 : vector<2x4xf32>
    %cst_15 = arith.constant 0.000000e+00 : f32
    %203 = vector.broadcast %cst_15 : f32 to vector<2x4xf32>
    %204 = arith.subf %203, %202 : vector<2x4xf32>
    %205 = math.exp %204 : vector<2x4xf32>
    %206 = math.log1p %205 : vector<2x4xf32>
    %207 = arith.addf %201, %206 : vector<2x4xf32>
    %208 = arith.mulf %1, %207 : vector<2x4xf32>
    %209 = arith.addf %158, %208 : vector<2x4xf32>
    %c34 = arith.constant 34 : index
    %c0_16 = arith.constant 0 : index
    %210 = vector.load %arg1[%c34, %c0_16] : memref<45x8xf32, #tpu.memory_space<vmem>>, vector<4x2xf32>
    %211 = vector.extract_strided_slice %209 {offsets = [0, 0], sizes = [2, 1], strides = [1, 1]} : vector<2x4xf32> to vector<2x1xf32>
    %212 = vector.extract_strided_slice %210 {offsets = [0, 0], sizes = [1, 2], strides = [1, 1]} : vector<4x2xf32> to vector<1x2xf32>
    %213 = vector.broadcast %211 : vector<2x1xf32> to vector<2x2xf32>
    %214 = vector.broadcast %212 : vector<1x2xf32> to vector<2x2xf32>
    %215 = arith.mulf %213, %214 : vector<2x2xf32>
    %216 = vector.extract_strided_slice %209 {offsets = [0, 1], sizes = [2, 1], strides = [1, 1]} : vector<2x4xf32> to vector<2x1xf32>
    %217 = vector.extract_strided_slice %210 {offsets = [1, 0], sizes = [1, 2], strides = [1, 1]} : vector<4x2xf32> to vector<1x2xf32>
    %218 = vector.broadcast %216 : vector<2x1xf32> to vector<2x2xf32>
    %219 = vector.broadcast %217 : vector<1x2xf32> to vector<2x2xf32>
    %220 = arith.mulf %218, %219 : vector<2x2xf32>
    %221 = arith.addf %215, %220 : vector<2x2xf32>
    %222 = vector.extract_strided_slice %209 {offsets = [0, 2], sizes = [2, 1], strides = [1, 1]} : vector<2x4xf32> to vector<2x1xf32>
    %223 = vector.extract_strided_slice %210 {offsets = [2, 0], sizes = [1, 2], strides = [1, 1]} : vector<4x2xf32> to vector<1x2xf32>
    %224 = vector.broadcast %222 : vector<2x1xf32> to vector<2x2xf32>
    %225 = vector.broadcast %223 : vector<1x2xf32> to vector<2x2xf32>
    %226 = arith.mulf %224, %225 : vector<2x2xf32>
    %227 = arith.addf %221, %226 : vector<2x2xf32>
    %228 = vector.extract_strided_slice %209 {offsets = [0, 3], sizes = [2, 1], strides = [1, 1]} : vector<2x4xf32> to vector<2x1xf32>
    %229 = vector.extract_strided_slice %210 {offsets = [3, 0], sizes = [1, 2], strides = [1, 1]} : vector<4x2xf32> to vector<1x2xf32>
    %230 = vector.broadcast %228 : vector<2x1xf32> to vector<2x2xf32>
    %231 = vector.broadcast %229 : vector<1x2xf32> to vector<2x2xf32>
    %232 = arith.mulf %230, %231 : vector<2x2xf32>
    %233 = arith.addf %227, %232 : vector<2x2xf32>
    %c38 = arith.constant 38 : index
    %c0_17 = arith.constant 0 : index
    %234 = vector.load %arg1[%c38, %c0_17] : memref<45x8xf32, #tpu.memory_space<vmem>>, vector<1x2xf32>
    %235 = vector.broadcast %234 : vector<1x2xf32> to vector<2x2xf32>
    %236 = arith.addf %233, %235 : vector<2x2xf32>
    %237 = vector.extract_strided_slice %236 {offsets = [0, 1], sizes = [2, 1], strides = [1, 1]} : vector<2x2xf32> to vector<2x1xf32>
    %238 = vector.extract_strided_slice %236 {offsets = [0, 0], sizes = [2, 1], strides = [1, 1]} : vector<2x2xf32> to vector<2x1xf32>
    %239 = arith.cmpf ogt, %237, %238 : vector<2x1xf32>
    %c39 = arith.constant 39 : index
    %c0_18 = arith.constant 0 : index
    %240 = vector.load %arg1[%c39, %c0_18] : memref<45x8xf32, #tpu.memory_space<vmem>>, vector<2x4xf32>
    %c42 = arith.constant 42 : index
    %c0_19 = arith.constant 0 : index
    %241 = vector.load %arg1[%c42, %c0_19] : memref<45x8xf32, #tpu.memory_space<vmem>>, vector<2x4xf32>
    %242 = vector.extract_strided_slice %240 {offsets = [1, 0], sizes = [1, 4], strides = [1, 1]} : vector<2x4xf32> to vector<1x4xf32>
    %243 = vector.extract_strided_slice %240 {offsets = [0, 0], sizes = [1, 4], strides = [1, 1]} : vector<2x4xf32> to vector<1x4xf32>
    %244 = vector.shape_cast %239 : vector<2x1xi1> to vector<2x1xi1>
    %245 = vector.broadcast %244 : vector<2x1xi1> to vector<2x4xi1>
    %246 = vector.shape_cast %242 : vector<1x4xf32> to vector<1x4xf32>
    %247 = vector.broadcast %246 : vector<1x4xf32> to vector<2x4xf32>
    %248 = vector.shape_cast %243 : vector<1x4xf32> to vector<1x4xf32>
    %249 = vector.broadcast %248 : vector<1x4xf32> to vector<2x4xf32>
    %250 = arith.select %245, %247, %249 : vector<2x4xi1>, vector<2x4xf32>
    %c41 = arith.constant 41 : index
    %c0_20 = arith.constant 0 : index
    %251 = vector.load %arg1[%c41, %c0_20] : memref<45x8xf32, #tpu.memory_space<vmem>>, vector<1x4xf32>
    %252 = vector.broadcast %251 : vector<1x4xf32> to vector<2x4xf32>
    %253 = arith.addf %250, %252 : vector<2x4xf32>
    %254 = vector.extract_strided_slice %241 {offsets = [1, 0], sizes = [1, 4], strides = [1, 1]} : vector<2x4xf32> to vector<1x4xf32>
    %255 = vector.extract_strided_slice %241 {offsets = [0, 0], sizes = [1, 4], strides = [1, 1]} : vector<2x4xf32> to vector<1x4xf32>
    %256 = vector.shape_cast %239 : vector<2x1xi1> to vector<2x1xi1>
    %257 = vector.broadcast %256 : vector<2x1xi1> to vector<2x4xi1>
    %258 = vector.shape_cast %254 : vector<1x4xf32> to vector<1x4xf32>
    %259 = vector.broadcast %258 : vector<1x4xf32> to vector<2x4xf32>
    %260 = vector.shape_cast %255 : vector<1x4xf32> to vector<1x4xf32>
    %261 = vector.broadcast %260 : vector<1x4xf32> to vector<2x4xf32>
    %262 = arith.select %257, %259, %261 : vector<2x4xi1>, vector<2x4xf32>
    %c44 = arith.constant 44 : index
    %c0_21 = arith.constant 0 : index
    %263 = vector.load %arg1[%c44, %c0_21] : memref<45x8xf32, #tpu.memory_space<vmem>>, vector<1x4xf32>
    %264 = vector.broadcast %263 : vector<1x4xf32> to vector<2x4xf32>
    %265 = arith.addf %262, %264 : vector<2x4xf32>
    %cst_22 = arith.constant 5.000000e+00 : f32
    %266 = vector.broadcast %cst_22 : f32 to vector<2x4xf32>
    %267 = arith.subf %265, %266 : vector<2x4xf32>
    %cst_23 = arith.constant 0.000000e+00 : f32
    %268 = vector.broadcast %cst_23 : f32 to vector<2x4xf32>
    %269 = arith.maximumf %267, %268 : vector<2x4xf32>
    %270 = math.absf %267 : vector<2x4xf32>
    %cst_24 = arith.constant 0.000000e+00 : f32
    %271 = vector.broadcast %cst_24 : f32 to vector<2x4xf32>
    %272 = arith.subf %271, %270 : vector<2x4xf32>
    %273 = math.exp %272 : vector<2x4xf32>
    %274 = math.log1p %273 : vector<2x4xf32>
    %275 = arith.addf %269, %274 : vector<2x4xf32>
    %c0_25 = arith.constant 0 : index
    %c0_26 = arith.constant 0 : index
    %276 = vector.load %arg2[%c0_25, %c0_26] : memref<2x18xf32, #tpu.memory_space<vmem>>, vector<2x4xf32>
    tpu.vector_store %arg2[%c0_25, %c0_26], %158 {strides = array<i32>} : memref<2x18xf32, #tpu.memory_space<vmem>>, vector<2x4xf32>,
    %c0_27 = arith.constant 0 : index
    %c4 = arith.constant 4 : index
    %277 = vector.load %arg2[%c0_27, %c4] : memref<2x18xf32, #tpu.memory_space<vmem>>, vector<2x4xf32>
    tpu.vector_store %arg2[%c0_27, %c4], %207 {strides = array<i32>} : memref<2x18xf32, #tpu.memory_space<vmem>>, vector<2x4xf32>,
    %c0_28 = arith.constant 0 : index
    %c8 = arith.constant 8 : index
    %278 = vector.load %arg2[%c0_28, %c8] : memref<2x18xf32, #tpu.memory_space<vmem>>, vector<2x2xf32>
    tpu.vector_store %arg2[%c0_28, %c8], %236 {strides = array<i32>} : memref<2x18xf32, #tpu.memory_space<vmem>>, vector<2x2xf32>,
    %c0_29 = arith.constant 0 : index
    %c10_30 = arith.constant 10 : index
    %279 = vector.load %arg2[%c0_29, %c10_30] : memref<2x18xf32, #tpu.memory_space<vmem>>, vector<2x4xf32>
    tpu.vector_store %arg2[%c0_29, %c10_30], %253 {strides = array<i32>} : memref<2x18xf32, #tpu.memory_space<vmem>>, vector<2x4xf32>,
    %c0_31 = arith.constant 0 : index
    %c14 = arith.constant 14 : index
    %280 = vector.load %arg2[%c0_31, %c14] : memref<2x18xf32, #tpu.memory_space<vmem>>, vector<2x4xf32>
    tpu.vector_store %arg2[%c0_31, %c14], %275 {strides = array<i32>} : memref<2x18xf32, #tpu.memory_space<vmem>>, vector<2x4xf32>,
    return
  }
}

</mosaic_0001>

<llo_original>
// kernel: tpu_custom_call.1
$region0: #{tpu_custom_call.1}
  #allocation0 [shape = 'u32[]', space=smem, size = 0x4, offset = 0x4, fixed_abs, tag = 'smem constant byte address 0x4 - core index']
  #allocation1 [shape = 'u32[144,128]{1,0:T(1,128)}', space=vmem, size = 0x12000, scoped, tag = 'internal scratch']
  %s0 = inlined_call_operand.vmem [shape: f32[2,14], index: 0, kind: input, shape index: {}]
  %s1 = inlined_call_operand.vmem [shape: f32[45,8], index: 1, kind: input, shape index: {}]
  %s2 = inlined_call_operand.hbm [shape: f32[2,18], index: 2, kind: output, shape index: {}]
  %s3 = sld [smem:[#allocation0]]
  $region18: #{tpu_custom_call.1} parent=0
    _
  %s5 = ssub.s32 1, %s3
  %s6 = scalar_select 0, %s5, %s3
  $region1: #{tpu_custom_call.1} parent=0
    #allocation2 [shape = 'u8[1024]{0}', space=vmem, size = 0x400, scoped, tag = 'output window, operand 0, single buffered']
    #allocation3 [shape = 's32[1]{0}', space=sflag, size = 0x4, scoped, tag = 'scoped memory for tpu_custom_call.1']
    %7 = vsyncpa [#allocation3], 0
    // Predicated region
    $region2: #{tpu_custom_call.1} parent=1 // pred_check
      _
    $region3: #{tpu_custom_call.1} parent=1 // pred_check_branch
      %9 = sbr.rel (0) target = $region5
    $region4: #{tpu_custom_call.1} parent=1 // pred_region
      _
    $region5: #{tpu_custom_call.1} parent=1 // pred_fallthru
      _
    // Predicated region
    $region6: #{tpu_custom_call.1} parent=1 // pred_check
      _
    $region7: #{tpu_custom_call.1} parent=1 // pred_check_branch
      %11 = sbr.rel (0) target = $region9
    $region8: #{tpu_custom_call.1} parent=1 // pred_region
      _
    $region9: #{tpu_custom_call.1} parent=1 // pred_fallthru
      _
    %v12 = vld [vmem:[%s0] sm:$0x3]
    %v13 = vld [vmem:[%s1] sm:$0xff]
    %v14 = vld [vmem:[%s1 + $0x8] sm:$0x3]
    %16 = vset.pattern.permute.xlu0 0
    %17 = vperm.xlu0 %16, %v12
    %v18 = vpop.permute.xlu0 %17
    %v20 = vlaneseq
    %v21 = vshrl.u32 %v20, 7
    %v22 = vsub.s32 0, %v21
    %v23 = vrot.slane %v13, %v22
    %v24 = vmul.f32 %v18, %v23
    %25 = vset.pattern.permute.xlu0 1
    %26 = vperm.xlu0 %25, %v12
    %v27 = vpop.permute.xlu0 %26
    %v29 = vlaneseq
    %v30 = vshrl.u32 %v29, 7
    %v31 = vsub.s32 1, %v30
    %v32 = vrot.slane %v13, %v31
    %v33 = vmul.f32 %v27, %v32
    %v34 = vadd.f32 %v24, %v33
    %35 = vset.pattern.permute.xlu0 2
    %36 = vperm.xlu0 %35, %v12
    %v37 = vpop.permute.xlu0 %36
    %v39 = vlaneseq
    %v40 = vshrl.u32 %v39, 7
    %v41 = vsub.s32 2, %v40
    %v42 = vrot.slane %v13, %v41
    %v43 = vmul.f32 %v37, %v42
    %v44 = vadd.f32 %v34, %v43
    %45 = vset.pattern.permute.xlu0 3
    %46 = vperm.xlu0 %45, %v12
    %v47 = vpop.permute.xlu0 %46
    %v49 = vlaneseq
    %v50 = vshrl.u32 %v49, 7
    %v51 = vsub.s32 3, %v50
    %v52 = vrot.slane %v13, %v51
    %v53 = vmul.f32 %v47, %v52
    %v54 = vadd.f32 %v44, %v53
    %55 = vset.pattern.permute.xlu0 4
    %56 = vperm.xlu0 %55, %v12
    %v57 = vpop.permute.xlu0 %56
    %v59 = vlaneseq
    %v60 = vshrl.u32 %v59, 7
    %v61 = vsub.s32 4, %v60
    %v62 = vrot.slane %v13, %v61
    %v63 = vmul.f32 %v57, %v62
    %v64 = vadd.f32 %v54, %v63
    %65 = vset.pattern.permute.xlu0 5
    %66 = vperm.xlu0 %65, %v12
    %v67 = vpop.permute.xlu0 %66
    %v69 = vlaneseq
    %v70 = vshrl.u32 %v69, 7
    %v71 = vsub.s32 5, %v70
    %v72 = vrot.slane %v13, %v71
    %v73 = vmul.f32 %v67, %v72
    %v74 = vadd.f32 %v64, %v73
    %75 = vset.pattern.permute.xlu0 6
    %76 = vperm.xlu0 %75, %v12
    %v77 = vpop.permute.xlu0 %76
    %v79 = vlaneseq
    %v80 = vshrl.u32 %v79, 7
    %v81 = vsub.s32 6, %v80
    %v82 = vrot.slane %v13, %v81
    %v83 = vmul.f32 %v77, %v82
    %v84 = vadd.f32 %v74, %v83
    %85 = vset.pattern.permute.xlu0 7
    %86 = vperm.xlu0 %85, %v12
    %v87 = vpop.permute.xlu0 %86
    %v89 = vlaneseq
    %v90 = vshrl.u32 %v89, 7
    %v91 = vsub.s32 7, %v90
    %v92 = vrot.slane %v13, %v91
    %v93 = vmul.f32 %v87, %v92
    %v94 = vadd.f32 %v84, %v93
    %95 = vset.pattern.permute.xlu0 8
    %96 = vperm.xlu0 %95, %v12
    %v97 = vpop.permute.xlu0 %96
    %v99 = vlaneseq
    %v100 = vshrl.u32 %v99, 7
    %v101 = vsub.s32 0, %v100
    %v102 = vrot.slane %v14, %v101
    %v103 = vmul.f32 %v97, %v102
    %v104 = vadd.f32 %v94, %v103
    %105 = vset.pattern.permute.xlu0 9
    %106 = vperm.xlu0 %105, %v12
    %v107 = vpop.permute.xlu0 %106
    %v109 = vlaneseq
    %v110 = vshrl.u32 %v109, 7
    %v111 = vsub.s32 1, %v110
    %v112 = vrot.slane %v14, %v111
    %v113 = vmul.f32 %v107, %v112
    %v114 = vadd.f32 %v104, %v113
    %v115 = vld [vmem:[%s1 + $0xa] sm:$0x1]
    %v116 = vlaneseq
    %v117 = vshrl.u32 %v116, 7
    %v118 = vsub.s32 0, %v117
    %v119 = vrot.slane %v115, %v118
    %v120 = vadd.f32 %v114, %v119
    %v121 = vmax.f32 %v120, 0.0
    %v122 = vld [vmem:[%s1 + $0xb] sm:$0xff]
    %124 = vset.pattern.permute.xlu0 0
    %125 = vperm.xlu0 %124, %v121
    %v126 = vpop.permute.xlu0 %125
    %v128 = vlaneseq
    %v129 = vshrl.u32 %v128, 7
    %v130 = vsub.s32 0, %v129
    %v131 = vrot.slane %v122, %v130
    %v132 = vmul.f32 %v126, %v131
    %133 = vset.pattern.permute.xlu0 1
    %134 = vperm.xlu0 %133, %v121
    %v135 = vpop.permute.xlu0 %134
    %v137 = vlaneseq
    %v138 = vshrl.u32 %v137, 7
    %v139 = vsub.s32 1, %v138
    %v140 = vrot.slane %v122, %v139
    %v141 = vmul.f32 %v135, %v140
    %v142 = vadd.f32 %v132, %v141
    %143 = vset.pattern.permute.xlu0 2
    %144 = vperm.xlu0 %143, %v121
    %v145 = vpop.permute.xlu0 %144
    %v147 = vlaneseq
    %v148 = vshrl.u32 %v147, 7
    %v149 = vsub.s32 2, %v148
    %v150 = vrot.slane %v122, %v149
    %v151 = vmul.f32 %v145, %v150
    %v152 = vadd.f32 %v142, %v151
    %153 = vset.pattern.permute.xlu0 3
    %154 = vperm.xlu0 %153, %v121
    %v155 = vpop.permute.xlu0 %154
    %v157 = vlaneseq
    %v158 = vshrl.u32 %v157, 7
    %v159 = vsub.s32 3, %v158
    %v160 = vrot.slane %v122, %v159
    %v161 = vmul.f32 %v155, %v160
    %v162 = vadd.f32 %v152, %v161
    %163 = vset.pattern.permute.xlu0 4
    %164 = vperm.xlu0 %163, %v121
    %v165 = vpop.permute.xlu0 %164
    %v167 = vlaneseq
    %v168 = vshrl.u32 %v167, 7
    %v169 = vsub.s32 4, %v168
    %v170 = vrot.slane %v122, %v169
    %v171 = vmul.f32 %v165, %v170
    %v172 = vadd.f32 %v162, %v171
    %173 = vset.pattern.permute.xlu0 5
    %174 = vperm.xlu0 %173, %v121
    %v175 = vpop.permute.xlu0 %174
    %v177 = vlaneseq
    %v178 = vshrl.u32 %v177, 7
    %v179 = vsub.s32 5, %v178
    %v180 = vrot.slane %v122, %v179
    %v181 = vmul.f32 %v175, %v180
    %v182 = vadd.f32 %v172, %v181
    %183 = vset.pattern.permute.xlu0 6
    %184 = vperm.xlu0 %183, %v121
    %v185 = vpop.permute.xlu0 %184
    %v187 = vlaneseq
    %v188 = vshrl.u32 %v187, 7
    %v189 = vsub.s32 6, %v188
    %v190 = vrot.slane %v122, %v189
    %v191 = vmul.f32 %v185, %v190
    %v192 = vadd.f32 %v182, %v191
    %193 = vset.pattern.permute.xlu0 7
    %194 = vperm.xlu0 %193, %v121
    %v195 = vpop.permute.xlu0 %194
    %v197 = vlaneseq
    %v198 = vshrl.u32 %v197, 7
    %v199 = vsub.s32 7, %v198
    %v200 = vrot.slane %v122, %v199
    %v201 = vmul.f32 %v195, %v200
    %v202 = vadd.f32 %v192, %v201
    %v203 = vld [vmem:[%s1 + $0x13] sm:$0x1]
    %v204 = vlaneseq
    %v205 = vshrl.u32 %v204, 7
    %v206 = vsub.s32 0, %v205
    %v207 = vrot.slane %v203, %v206
    %v208 = vadd.f32 %v202, %v207
    %v209 = vmax.f32 %v208, 0.0
    %v210 = vld [vmem:[%s1 + $0x14] sm:$0x3f]
    %212 = vset.pattern.permute.xlu0 0
    %213 = vperm.xlu0 %212, %v209
    %v214 = vpop.permute.xlu0 %213
    %v216 = vlaneseq
    %v217 = vshrl.u32 %v216, 7
    %v218 = vsub.s32 0, %v217
    %v219 = vrot.slane %v210, %v218
    %v220 = vmul.f32 %v214, %v219
    %221 = vset.pattern.permute.xlu0 1
    %222 = vperm.xlu0 %221, %v209
    %v223 = vpop.permute.xlu0 %222
    %v225 = vlaneseq
    %v226 = vshrl.u32 %v225, 7
    %v227 = vsub.s32 1, %v226
    %v228 = vrot.slane %v210, %v227
    %v229 = vmul.f32 %v223, %v228
    %v230 = vadd.f32 %v220, %v229
    %231 = vset.pattern.permute.xlu0 2
    %232 = vperm.xlu0 %231, %v209
    %v233 = vpop.permute.xlu0 %232
    %v235 = vlaneseq
    %v236 = vshrl.u32 %v235, 7
    %v237 = vsub.s32 2, %v236
    %v238 = vrot.slane %v210, %v237
    %v239 = vmul.f32 %v233, %v238
    %v240 = vadd.f32 %v230, %v239
    %241 = vset.pattern.permute.xlu0 3
    %242 = vperm.xlu0 %241, %v209
    %v243 = vpop.permute.xlu0 %242
    %v245 = vlaneseq
    %v246 = vshrl.u32 %v245, 7
    %v247 = vsub.s32 3, %v246
    %v248 = vrot.slane %v210, %v247
    %v249 = vmul.f32 %v243, %v248
    %v250 = vadd.f32 %v240, %v249
    %251 = vset.pattern.permute.xlu0 4
    %252 = vperm.xlu0 %251, %v209
    %v253 = vpop.permute.xlu0 %252
    %v255 = vlaneseq
    %v256 = vshrl.u32 %v255, 7
    %v257 = vsub.s32 4, %v256
    %v258 = vrot.slane %v210, %v257
    %v259 = vmul.f32 %v253, %v258
    %v260 = vadd.f32 %v250, %v259
    %261 = vset.pattern.permute.xlu0 5
    %262 = vperm.xlu0 %261, %v209
    %v263 = vpop.permute.xlu0 %262
    %v265 = vlaneseq
    %v266 = vshrl.u32 %v265, 7
    %v267 = vsub.s32 5, %v266
    %v268 = vrot.slane %v210, %v267
    %v269 = vmul.f32 %v263, %v268
    %v270 = vadd.f32 %v260, %v269
    %v271 = vld [vmem:[%s1 + $0x1a] sm:$0x1]
    %v272 = vlaneseq
    %v273 = vshrl.u32 %v272, 7
    %v274 = vsub.s32 0, %v273
    %v275 = vrot.slane %v271, %v274
    %v276 = vadd.f32 %v270, %v275
    %v277 = vld [vmem:[%s1 + $0x1b] sm:$0x3f]
    %v278 = vlaneseq
    %v279 = vshrl.u32 %v278, 7
    %v280 = vsub.s32 0, %v279
    %v281 = vrot.slane %v277, %v280
    %v282 = vmul.f32 %v214, %v281
    %v283 = vlaneseq
    %v284 = vshrl.u32 %v283, 7
    %v285 = vsub.s32 1, %v284
    %v286 = vrot.slane %v277, %v285
    %v287 = vmul.f32 %v223, %v286
    %v288 = vadd.f32 %v282, %v287
    %v289 = vlaneseq
    %v290 = vshrl.u32 %v289, 7
    %v291 = vsub.s32 2, %v290
    %v292 = vrot.slane %v277, %v291
    %v293 = vmul.f32 %v233, %v292
    %v294 = vadd.f32 %v288, %v293
    %v295 = vlaneseq
    %v296 = vshrl.u32 %v295, 7
    %v297 = vsub.s32 3, %v296
    %v298 = vrot.slane %v277, %v297
    %v299 = vmul.f32 %v243, %v298
    %v300 = vadd.f32 %v294, %v299
    %v301 = vlaneseq
    %v302 = vshrl.u32 %v301, 7
    %v303 = vsub.s32 4, %v302
    %v304 = vrot.slane %v277, %v303
    %v305 = vmul.f32 %v253, %v304
    %v306 = vadd.f32 %v300, %v305
    %v307 = vlaneseq
    %v308 = vshrl.u32 %v307, 7
    %v309 = vsub.s32 5, %v308
    %v310 = vrot.slane %v277, %v309
    %v311 = vmul.f32 %v263, %v310
    %v312 = vadd.f32 %v306, %v311
    %v313 = vld [vmem:[%s1 + $0x21] sm:$0x1]
    %v314 = vlaneseq
    %v315 = vshrl.u32 %v314, 7
    %v316 = vsub.s32 0, %v315
    %v317 = vrot.slane %v313, %v316
    %v318 = vadd.f32 %v312, %v317
    %v319 = vsub.f32 %v318, 5.0
    %v320 = vmax.f32 %v319, 0.0
    %v321 = vand.u32 2147483647, %v319
    %v322 = vsub.f32 0.0, %v321
    %v323 = vmul.f32 %v322, 1.442695
    %v324 = vpow.pop %v323
    %v325 = vadd.f32 %v324, 1.0
    %v326 = vlog2.pop %v325
    %v327 = vmul.f32 %v326, 0.6931472
    %v328 = vmul.f32 -0.5, %v324
    %v329 = vadd.f32 %v328, 1.0
    %v330 = vmul.f32 %v329, %v324
    %v331 = vand.u32 2147483647, %v324
    %vm332 = vcmp.lt.f32.partialorder %v331, 0.0004427343
    %v333 = vsel %vm332, %v330, %v327
    %v334 = vadd.f32 %v320, %v333
    %336 = vrot.lane.b32.xlu0 %v334, 10
    %v337 = vpop.permute.xlu0 %336
    %v339 = vmul.f32 %v12, %v337
    %341 = vrot.lane.b32.xlu0 %v339, 118
    %v342 = vpop.permute.xlu0 %341
    %v344 = vadd.f32 %v276, %v342
    %v345 = vld [vmem:[%s1 + $0x22] sm:$0xf]
    %347 = vset.pattern.permute.xlu0 0
    %348 = vperm.xlu0 %347, %v344
    %v349 = vpop.permute.xlu0 %348
    %v351 = vlaneseq
    %v352 = vshrl.u32 %v351, 7
    %v353 = vsub.s32 0, %v352
    %v354 = vrot.slane %v345, %v353
    %v355 = vmul.f32 %v349, %v354
    %356 = vset.pattern.permute.xlu0 1
    %357 = vperm.xlu0 %356, %v344
    %v358 = vpop.permute.xlu0 %357
    %v360 = vlaneseq
    %v361 = vshrl.u32 %v360, 7
    %v362 = vsub.s32 1, %v361
    %v363 = vrot.slane %v345, %v362
    %v364 = vmul.f32 %v358, %v363
    %v365 = vadd.f32 %v355, %v364
    %366 = vset.pattern.permute.xlu0 2
    %367 = vperm.xlu0 %366, %v344
    %v368 = vpop.permute.xlu0 %367
    %v370 = vlaneseq
    %v371 = vshrl.u32 %v370, 7
    %v372 = vsub.s32 2, %v371
    %v373 = vrot.slane %v345, %v372
    %v374 = vmul.f32 %v368, %v373
    %v375 = vadd.f32 %v365, %v374
    %376 = vset.pattern.permute.xlu0 3
    %377 = vperm.xlu0 %376, %v344
    %v378 = vpop.permute.xlu0 %377
    %v380 = vlaneseq
    %v381 = vshrl.u32 %v380, 7
    %v382 = vsub.s32 3, %v381
    %v383 = vrot.slane %v345, %v382
    %v384 = vmul.f32 %v378, %v383
    %v385 = vadd.f32 %v375, %v384
    %v386 = vld [vmem:[%s1 + $0x26] sm:$0x1]
    %v387 = vlaneseq
    %v388 = vshrl.u32 %v387, 7
    %v389 = vsub.s32 0, %v388
    %v390 = vrot.slane %v386, %v389
    %v391 = vadd.f32 %v385, %v390
    %393 = vrot.lane.b32.xlu0 %v391, 1
    %v394 = vpop.permute.xlu0 %393
    %vm396 = vcmp.gt.f32.partialorder %v391, %v394
    %v397 = vld [vmem:[%s1 + $0x27] sm:$0x3]
    %v398 = vld [vmem:[%s1 + $0x2a] sm:$0x3]
    %v399 = vsel %vm396, 1, 0
    %400 = vset.pattern.permute.xlu0 1
    %401 = vperm.xlu0 %400, %v399
    %v402 = vpop.permute.xlu0 %401
    %vm403 = vcmp.eq.s32.totalorder %v402, 1
    %v404 = vlaneseq
    %v405 = vshrl.u32 %v404, 7
    %v406 = vsub.s32 1, %v405
    %v407 = vrot.slane %v397, %v406
    %v408 = vlaneseq
    %v409 = vshrl.u32 %v408, 7
    %v410 = vsub.s32 0, %v409
    %v411 = vrot.slane %v397, %v410
    %v412 = vsel %vm403, %v407, %v411
    %v413 = vld [vmem:[%s1 + $0x29] sm:$0x1]
    %v414 = vlaneseq
    %v415 = vshrl.u32 %v414, 7
    %v416 = vsub.s32 0, %v415
    %v417 = vrot.slane %v413, %v416
    %v418 = vadd.f32 %v412, %v417
    %v419 = vlaneseq
    %v420 = vshrl.u32 %v419, 7
    %v421 = vsub.s32 1, %v420
    %v422 = vrot.slane %v398, %v421
    %v423 = vlaneseq
    %v424 = vshrl.u32 %v423, 7
    %v425 = vsub.s32 0, %v424
    %v426 = vrot.slane %v398, %v425
    %v427 = vsel %vm403, %v422, %v426
    %v428 = vld [vmem:[%s1 + $0x2c] sm:$0x1]
    %v429 = vlaneseq
    %v430 = vshrl.u32 %v429, 7
    %v431 = vsub.s32 0, %v430
    %v432 = vrot.slane %v428, %v431
    %v433 = vadd.f32 %v427, %v432
    %v434 = vsub.f32 %v433, 5.0
    %v435 = vmax.f32 %v434, 0.0
    %v436 = vand.u32 2147483647, %v434
    %v437 = vsub.f32 0.0, %v436
    %v438 = vmul.f32 %v437, 1.442695
    %v439 = vpow.pop %v438
    %v440 = vadd.f32 %v439, 1.0
    %v441 = vlog2.pop %v440
    %v442 = vmul.f32 %v441, 0.6931472
    %v443 = vmul.f32 -0.5, %v439
    %v444 = vadd.f32 %v443, 1.0
    %v445 = vmul.f32 %v444, %v439
    %v446 = vand.u32 2147483647, %v439
    %vm447 = vcmp.lt.f32.partialorder %v446, 0.0004427343
    %v448 = vsel %vm447, %v445, %v442
    %v449 = vadd.f32 %v435, %v448
    %vm450 = vcmask 25600
    %451 = vst.msk [vmem:[#allocation2] sm:$0x3] %vm450, %v276
    %452 = vrot.lane.b32.xlu0 %v334, 4
    %v453 = vpop.permute.xlu0 %452
    %vm455 = vcmask 58400
    %456 = vst.msk [vmem:[#allocation2] sm:$0x3] %vm455, %v453
    %457 = vrot.lane.b32.xlu0 %v391, 8
    %v458 = vpop.permute.xlu0 %457
    %vm460 = vcmask 74816
    %461 = vst.msk [vmem:[#allocation2] sm:$0x3] %vm460, %v458
    %463 = vrot.lane.b32.xlu0 %v418, 10
    %v464 = vpop.permute.xlu0 %463
    %vm466 = vcmask 107600
    %467 = vst.msk [vmem:[#allocation2] sm:$0x3] %vm466, %v464
    %469 = vrot.lane.b32.xlu0 %v449, 14
    %v470 = vpop.permute.xlu0 %469
    %vm472 = vcmask 140400
    %473 = vst.msk [vmem:[#allocation2] sm:$0x3] %vm472, %v470
    // Predicated region
    $region10: #{tpu_custom_call.1} parent=1 // pred_check
      _
    $region11: #{tpu_custom_call.1} parent=1 // pred_check_branch
      %475 = sbr.rel (0) target = $region13
    $region12: #{tpu_custom_call.1} parent=1 // pred_region
      %s477 = ssub.s32 32, 32
      %478 = vsyncadd [#allocation3], %s477
      %s480 = sshll.u32 [#allocation2], 4
      %s481 = int_to_ptr.vmem [resolvable:$true] %s480
      %483 = dma.vmem_to_hbm [thread:$0]  %s481, 32, %s2, [#allocation3]
    $region13: #{tpu_custom_call.1} parent=1 // pred_fallthru
      _
    // Predicated region
    $region14: #{tpu_custom_call.1} parent=1 // pred_check
      _
    $region15: #{tpu_custom_call.1} parent=1 // pred_check_branch
      %485 = sbr.rel (0) target = $region17
    $region16: #{tpu_custom_call.1} parent=1 // pred_region
      %486 = dma.done [#allocation3], 32
    $region17: #{tpu_custom_call.1} parent=1 // pred_fallthru
      _
    %487 = vsyncpa [#allocation3], 1

</llo_original>
